<compile_context>
chip_gen: v5e
topology: v5e:2x2
jax: 0.10.0
libtpu: 0.0.40
codegen_flags: <defaults>
</compile_context>

<pallas_src>
import jax
import jax.numpy as jnp
from jax.experimental import pallas as pl
from jax.experimental.pallas import tpu as pltpu

LANE = 128          # lane width: feature dims padded to this
SUBLANE = 8         # sublane granularity for the batch tile
DEFAULT_TILE_B = 512  # batch rows per grid step (multiple of 8); ~85% HBM roofline on v6e


def _round_up(n, m):
    return ((n + m - 1) // m) * m


def _mlp_kernel(x_ref, w1_ref, b1_ref, w2_ref, b2_ref, w3_ref, b3_ref, o_ref):
    # Biases read once per invocation (f32), broadcast over the batch tile.
    b1 = b1_ref[...]
    b2 = b2_ref[...]
    b3 = b3_ref[...]

    # Layer 1: Linear (MXU, f32 accumulation) + bias + ReLU   (dropout -> identity)
    h = jnp.dot(x_ref[...], w1_ref[...], preferred_element_type=jnp.float32)
    h = jnp.maximum(h + b1, 0.0)

    # Layer 2: Linear + bias + ReLU                            (dropout -> identity)
    h = jnp.dot(h.astype(w2_ref.dtype), w2_ref[...],
                preferred_element_type=jnp.float32)
    h = jnp.maximum(h + b2, 0.0)

    # Output layer: Linear + bias (lane-dense 128-wide store; wrapper slices to out_size)
    o = jnp.dot(h.astype(w3_ref.dtype), w3_ref[...],
                preferred_element_type=jnp.float32)
    o_ref[...] = (o + b3).astype(o_ref.dtype)


def traffic_predictor_forward(x, params, *, compute_dtype=jnp.bfloat16,
                              tile_b=DEFAULT_TILE_B):
    """x: [batch, input_size] float32.  params: dict of w1,b1,w2,b2,w3,b3
    with weights stored [in_features, out_features] (transposed vs PyTorch)."""
    w1, b1 = params["w1"], params["b1"]
    w2, b2 = params["w2"], params["b2"]
    w3, b3 = params["w3"], params["b3"]

    batch, in_size = x.shape
    hid = w1.shape[1]
    out_size = w3.shape[1]

    # Lane-dense padded feature dims (zeros -> math unchanged).
    in_p = _round_up(in_size, LANE)
    hid_p = _round_up(hid, LANE)
    out_p = _round_up(out_size, LANE)

    # Batch tile: large, multiple of 8, never bigger than the (padded) batch.
    tb = min(tile_b, _round_up(batch, SUBLANE))
    batch_p = _round_up(batch, tb)
    grid = (pl.cdiv(batch_p, tb),)

    # Zero-padded operands. Matmul operands in compute_dtype (bf16 by default),
    # biases stay f32 (bias add / ReLU done in f32 inside the kernel).
    x_p = jnp.zeros((batch_p, in_p), compute_dtype).at[:batch, :in_size].set(
        x.astype(compute_dtype))
    w1_p = jnp.zeros((in_p, hid_p), compute_dtype).at[:in_size, :hid].set(
        w1.astype(compute_dtype))
    w2_p = jnp.zeros((hid_p, hid_p), compute_dtype).at[:hid, :hid].set(
        w2.astype(compute_dtype))
    w3_p = jnp.zeros((hid_p, out_p), compute_dtype).at[:hid, :out_size].set(
        w3.astype(compute_dtype))
    b1_p = jnp.zeros((1, hid_p), jnp.float32).at[0, :hid].set(b1)
    b2_p = jnp.zeros((1, hid_p), jnp.float32).at[0, :hid].set(b2)
    b3_p = jnp.zeros((1, out_p), jnp.float32).at[0, :out_size].set(b3)

    resident = lambda shape: pl.BlockSpec(shape, lambda i: (0, 0))  # VMEM-resident

    out_padded = pl.pallas_call(
        _mlp_kernel,
        out_shape=jax.ShapeDtypeStruct((batch_p, out_p), jnp.float32),
        grid=grid,
        in_specs=[
            pl.BlockSpec((tb, in_p), lambda i: (i, 0)),   # x: tiled over batch
            resident((in_p, hid_p)), resident((1, hid_p)),
            resident((hid_p, hid_p)), resident((1, hid_p)),
            resident((hid_p, out_p)), resident((1, out_p)),
        ],
        out_specs=pl.BlockSpec((tb, out_p), lambda i: (i, 0)),
        compiler_params=pltpu.CompilerParams(
            dimension_semantics=("parallel",)),   # megacore split on v7x
    )(x_p, w1_p, b1_p, w2_p, b2_p, w3_p, b3_p)

    return out_padded[:batch, :out_size]


def init_params(key, input_size, hidden_size, output_size):
    """Deterministic init mimicking nn.Linear's uniform(-1/sqrt(fan_in), 1/sqrt(fan_in)).
    Weights stored as [in, out] (transposed vs PyTorch's [out, in])."""
    ks = jax.random.split(key, 6)

    def linear(kw, kb, fan_in, fan_out):
        bound = 1.0 / jnp.sqrt(jnp.float32(fan_in))
        w = jax.random.uniform(kw, (fan_in, fan_out), jnp.float32, -bound, bound)
        b = jax.random.uniform(kb, (fan_out,), jnp.float32, -bound, bound)
        return w, b

    w1, b1 = linear(ks[0], ks[1], input_size, hidden_size)
    w2, b2 = linear(ks[2], ks[3], hidden_size, hidden_size)
    w3, b3 = linear(ks[4], ks[5], hidden_size, output_size)
    return {"w1": w1, "b1": b1, "w2": w2, "b2": b2, "w3": w3, "b3": b3}


def reference_forward(x, params):
    h = jnp.maximum(x @ params["w1"] + params["b1"], 0.0)
    h = jnp.maximum(h @ params["w2"] + params["b2"], 0.0)
    return h @ params["w3"] + params["b3"]


if __name__ == "__main__":
    input_size, hidden_size, output_size = 16, 32, 4
    batch = 8

    key = jax.random.PRNGKey(0)
    k_x, k_p, k_x2 = jax.random.split(key, 3)

    x = jax.random.normal(k_x, (batch, input_size), jnp.float32)
    params = init_params(k_p, input_size, hidden_size, output_size)
    ref = reference_forward(x, params)

    # Exact-parity path (f32 matmul operands).
    out_f32 = traffic_predictor_forward(x, params, compute_dtype=jnp.float32)
    out_f32 = jax.block_until_ready(out_f32)
    assert out_f32.shape == (batch, output_size)
    assert jnp.allclose(out_f32, ref, atol=1e-5, rtol=1e-5), "f32 mismatch vs reference"

    # Fast path (bf16 matmul operands, f32 accumulation) — default.
    out_bf16 = traffic_predictor_forward(x, params)
    out_bf16 = jax.block_until_ready(out_bf16)
    assert out_bf16.shape == (batch, output_size)
    assert jnp.allclose(out_bf16, ref, atol=5e-2, rtol=5e-2), "bf16 mismatch vs reference"

    # Multi-tile grid sanity check (batch not a multiple of TILE_B -> padded, grid > 1).
    batch2 = 520
    x2 = jax.random.normal(k_x2, (batch2, input_size), jnp.float32)
    out2 = traffic_predictor_forward(x2, params, compute_dtype=jnp.float32)
    out2 = jax.block_until_ready(out2)
    ref2 = reference_forward(x2, params)
    assert out2.shape == (batch2, output_size)
    assert jnp.allclose(out2, ref2, atol=1e-5, rtol=1e-5), "tiled-batch mismatch vs reference"

    print("KERNEL_OK")
</pallas_src>

<mosaic_0001>
module attributes {stable_mosaic.version = 11 : i64} {
  func.func @_mlp_kernel(%arg0: i32, %arg1: memref<8x128xf32, #tpu.memory_space<vmem>>, %arg2: memref<128x128xf32, #tpu.memory_space<vmem>>, %arg3: memref<1x128xf32, #tpu.memory_space<vmem>>, %arg4: memref<128x128xf32, #tpu.memory_space<vmem>>, %arg5: memref<1x128xf32, #tpu.memory_space<vmem>>, %arg6: memref<128x128xf32, #tpu.memory_space<vmem>>, %arg7: memref<1x128xf32, #tpu.memory_space<vmem>>, %arg8: memref<8x128xf32, #tpu.memory_space<vmem>>) attributes {dimension_semantics = [#tpu.dimension_semantics<parallel>], iteration_bounds = array<i64: 1>, scalar_prefetch = 0 : i64, scratch_operands = 0 : i64, tpu.core_type = #tpu.core_type<tc>, window_params = [{transform_indices = @transform_0, window_bounds = array<i64: 8, 128>}, {pipeline_mode = #tpu.pipeline_mode<synchronous>, transform_indices = @transform_1, window_bounds = array<i64: 128, 128>}, {pipeline_mode = #tpu.pipeline_mode<synchronous>, transform_indices = @transform_2, window_bounds = array<i64: 1, 128>}, {pipeline_mode = #tpu.pipeline_mode<synchronous>, transform_indices = @transform_3, window_bounds = array<i64: 128, 128>}, {pipeline_mode = #tpu.pipeline_mode<synchronous>, transform_indices = @transform_4, window_bounds = array<i64: 1, 128>}, {pipeline_mode = #tpu.pipeline_mode<synchronous>, transform_indices = @transform_5, window_bounds = array<i64: 128, 128>}, {pipeline_mode = #tpu.pipeline_mode<synchronous>, transform_indices = @transform_6, window_bounds = array<i64: 1, 128>}, {transform_indices = @transform_7, window_bounds = array<i64: 8, 128>}]} {
    %c0 = arith.constant 0 : index
    %c0_0 = arith.constant 0 : index
    %0 = vector.load %arg3[%c0, %c0_0] : memref<1x128xf32, #tpu.memory_space<vmem>>, vector<1x128xf32>
    %c0_1 = arith.constant 0 : index
    %c0_2 = arith.constant 0 : index
    %1 = vector.load %arg5[%c0_1, %c0_2] : memref<1x128xf32, #tpu.memory_space<vmem>>, vector<1x128xf32>
    %c0_3 = arith.constant 0 : index
    %c0_4 = arith.constant 0 : index
    %2 = vector.load %arg7[%c0_3, %c0_4] : memref<1x128xf32, #tpu.memory_space<vmem>>, vector<1x128xf32>
    %c0_5 = arith.constant 0 : index
    %c0_6 = arith.constant 0 : index
    %3 = vector.load %arg1[%c0_5, %c0_6] : memref<8x128xf32, #tpu.memory_space<vmem>>, vector<8x128xf32>
    %c0_7 = arith.constant 0 : index
    %c0_8 = arith.constant 0 : index
    %4 = vector.load %arg2[%c0_7, %c0_8] : memref<128x128xf32, #tpu.memory_space<vmem>>, vector<128x128xf32>
    %cst = arith.constant dense<0.000000e+00> : vector<8x128xf32>
    %5 = tpu.matmul %3, %4, %cst {dimension_numbers = #tpu.dot_dimension_numbers<[1], [0], [0], [1], [0, 0, 1, 1], [], []>} : vector<8x128xf32>, vector<128x128xf32>, vector<8x128xf32> -> vector<8x128xf32>
    %6 = vector.broadcast %0 : vector<1x128xf32> to vector<8x128xf32>
    %7 = arith.addf %5, %6 : vector<8x128xf32>
    %cst_9 = arith.constant 0.000000e+00 : f32
    %8 = vector.broadcast %cst_9 : f32 to vector<8x128xf32>
    %9 = arith.maximumf %7, %8 : vector<8x128xf32>
    %c0_10 = arith.constant 0 : index
    %c0_11 = arith.constant 0 : index
    %10 = vector.load %arg4[%c0_10, %c0_11] : memref<128x128xf32, #tpu.memory_space<vmem>>, vector<128x128xf32>
    %cst_12 = arith.constant dense<0.000000e+00> : vector<8x128xf32>
    %11 = tpu.matmul %9, %10, %cst_12 {dimension_numbers = #tpu.dot_dimension_numbers<[1], [0], [0], [1], [0, 0, 1, 1], [], []>} : vector<8x128xf32>, vector<128x128xf32>, vector<8x128xf32> -> vector<8x128xf32>
    %12 = vector.broadcast %1 : vector<1x128xf32> to vector<8x128xf32>
    %13 = arith.addf %11, %12 : vector<8x128xf32>
    %cst_13 = arith.constant 0.000000e+00 : f32
    %14 = vector.broadcast %cst_13 : f32 to vector<8x128xf32>
    %15 = arith.maximumf %13, %14 : vector<8x128xf32>
    %c0_14 = arith.constant 0 : index
    %c0_15 = arith.constant 0 : index
    %16 = vector.load %arg6[%c0_14, %c0_15] : memref<128x128xf32, #tpu.memory_space<vmem>>, vector<128x128xf32>
    %cst_16 = arith.constant dense<0.000000e+00> : vector<8x128xf32>
    %17 = tpu.matmul %15, %16, %cst_16 {dimension_numbers = #tpu.dot_dimension_numbers<[1], [0], [0], [1], [0, 0, 1, 1], [], []>} : vector<8x128xf32>, vector<128x128xf32>, vector<8x128xf32> -> vector<8x128xf32>
    %18 = vector.broadcast %2 : vector<1x128xf32> to vector<8x128xf32>
    %19 = arith.addf %17, %18 : vector<8x128xf32>
    %c0_17 = arith.constant 0 : index
    %c0_18 = arith.constant 0 : index
    %20 = vector.load %arg8[%c0_17, %c0_18] : memref<8x128xf32, #tpu.memory_space<vmem>>, vector<8x128xf32>
    tpu.vector_store %arg8[%c0_17, %c0_18], %19 {strides = array<i32>} : memref<8x128xf32, #tpu.memory_space<vmem>>, vector<8x128xf32>,
    return
  }
  func.func @transform_0(%arg0: i32) -> (i32, i32) {
    %c0_i32 = arith.constant 0 : i32
    %c0_i32_0 = arith.constant 0 : i32
    return %arg0, %c0_i32 : i32, i32
  }
  func.func @transform_1(%arg0: i32) -> (i32, i32) {
    %c0_i32 = arith.constant 0 : i32
    %c0_i32_0 = arith.constant 0 : i32
    %c0_i32_1 = arith.constant 0 : i32
    return %c0_i32, %c0_i32_0 : i32, i32
  }
  func.func @transform_2(%arg0: i32) -> (i32, i32) {
    %c0_i32 = arith.constant 0 : i32
    %c0_i32_0 = arith.constant 0 : i32
    %c0_i32_1 = arith.constant 0 : i32
    return %c0_i32, %c0_i32_0 : i32, i32
  }
  func.func @transform_3(%arg0: i32) -> (i32, i32) {
    %c0_i32 = arith.constant 0 : i32
    %c0_i32_0 = arith.constant 0 : i32
    %c0_i32_1 = arith.constant 0 : i32
    return %c0_i32, %c0_i32_0 : i32, i32
  }
  func.func @transform_4(%arg0: i32) -> (i32, i32) {
    %c0_i32 = arith.constant 0 : i32
    %c0_i32_0 = arith.constant 0 : i32
    %c0_i32_1 = arith.constant 0 : i32
    return %c0_i32, %c0_i32_0 : i32, i32
  }
  func.func @transform_5(%arg0: i32) -> (i32, i32) {
    %c0_i32 = arith.constant 0 : i32
    %c0_i32_0 = arith.constant 0 : i32
    %c0_i32_1 = arith.constant 0 : i32
    return %c0_i32, %c0_i32_0 : i32, i32
  }
  func.func @transform_6(%arg0: i32) -> (i32, i32) {
    %c0_i32 = arith.constant 0 : i32
    %c0_i32_0 = arith.constant 0 : i32
    %c0_i32_1 = arith.constant 0 : i32
    return %c0_i32, %c0_i32_0 : i32, i32
  }
  func.func @transform_7(%arg0: i32) -> (i32, i32) {
    %c0_i32 = arith.constant 0 : i32
    %c0_i32_0 = arith.constant 0 : i32
    return %arg0, %c0_i32 : i32, i32
  }
}

</mosaic_0001>

<llo_original>
// kernel: tpu_custom_call.1
$region0: #{tpu_custom_call.1}
  #allocation0 [shape = 'u32[]', space=smem, size = 0x4, offset = 0x4, fixed_abs, tag = 'smem constant byte address 0x4 - core index']
  #allocation1 [shape = 'u32[72,128]{1,0:T(1,128)}', space=vmem, size = 0x9000, scoped, tag = 'internal scratch']
  %s0 = inlined_call_operand.hbm [shape: f32[8,128], index: 0, kind: input, shape index: {}]
  %s1 = inlined_call_operand.hbm [shape: f32[128,128], index: 1, kind: input, shape index: {}]
  %s2 = inlined_call_operand.vmem [shape: f32[1,128], index: 2, kind: input, shape index: {}]
  %s3 = inlined_call_operand.hbm [shape: f32[128,128], index: 3, kind: input, shape index: {}]
  %s4 = inlined_call_operand.vmem [shape: f32[1,128], index: 4, kind: input, shape index: {}]
  %s5 = inlined_call_operand.hbm [shape: f32[128,128], index: 5, kind: input, shape index: {}]
  %s6 = inlined_call_operand.vmem [shape: f32[1,128], index: 6, kind: input, shape index: {}]
  %s7 = inlined_call_operand.hbm [shape: f32[8,128], index: 7, kind: output, shape index: {}]
  %s8 = sld [smem:[#allocation0]]
  $region54: #{tpu_custom_call.1} parent=0
    _
  %s10 = ssub.s32 1, %s8
  %s11 = scalar_select 0, %s10, %s8
  $region1: #{tpu_custom_call.1} parent=0
    #allocation2 [shape = 'u8[4096]{0}', space=vmem, size = 0x1000, scoped, tag = 'input window, operand 0, single buffered']
    #allocation3 [shape = 's32[1]{0}', space=sflag, size = 0x4, scoped, tag = 'scoped memory for tpu_custom_call.1']
    #allocation4 [shape = 's32[1]{0}', space=sflag, size = 0x4, scoped, tag = 'scoped memory for tpu_custom_call.1']
    #allocation5 [shape = 'u8[65536]{0}', space=vmem, size = 0x10000, scoped, tag = 'input window, operand 1, single buffered']
    #allocation6 [shape = 's32[1]{0}', space=sflag, size = 0x4, scoped, tag = 'scoped memory for tpu_custom_call.1']
    #allocation7 [shape = 'u8[65536]{0}', space=vmem, size = 0x10000, scoped, tag = 'input window, operand 3, single buffered']
    #allocation8 [shape = 'u8[65536]{0}', space=vmem, size = 0x10000, scoped, tag = 'input window, operand 5, single buffered']
    #allocation9 [shape = 's32[1]{0}', space=sflag, size = 0x4, scoped, tag = 'scoped memory for tpu_custom_call.1']
    #allocation10 [shape = 'u8[4096]{0}', space=vmem, size = 0x1000, scoped, tag = 'output window, operand 0, single buffered']
    %12 = vsyncpa [#allocation3], 0
    %13 = vsyncpa [#allocation6], 0
    %14 = vsyncpa [#allocation9], 0
    %15 = vsyncpa [#allocation4], 0
    // Predicated region
    $region2: #{tpu_custom_call.1} parent=1 // pred_check
      _
    $region3: #{tpu_custom_call.1} parent=1 // pred_check_branch
      %17 = sbr.rel (0) target = $region5
    $region4: #{tpu_custom_call.1} parent=1 // pred_region
      %19 = vsyncadd [#allocation3], 0
      %s21 = sshll.u32 %s0, 4
      %s22 = int_to_ptr.hbm [resolvable:$true] %s21
      %s23 = sshll.u32 [#allocation2], 4
      %s24 = int_to_ptr.vmem [resolvable:$true] %s23
      %26 = dma.hbm_to_vmem [thread:$0]  %s22, 128, %s24, [#allocation3]
    $region5: #{tpu_custom_call.1} parent=1 // pred_fallthru
      _
    // Predicated region
    $region6: #{tpu_custom_call.1} parent=1 // pred_check
      _
    $region7: #{tpu_custom_call.1} parent=1 // pred_check_branch
      %28 = sbr.rel (0) target = $region9
    $region8: #{tpu_custom_call.1} parent=1 // pred_region
      %30 = vsyncadd [#allocation6], 0
      %s31 = sshll.u32 %s1, 4
      %s32 = int_to_ptr.hbm [resolvable:$true] %s31
      %s33 = sshll.u32 [#allocation5], 4
      %s34 = int_to_ptr.vmem [resolvable:$true] %s33
      %39 = dma.hbm_to_vmem [thread:$0]  %s32, 2048, %s34, [#allocation6], 128, 128, 8
    $region9: #{tpu_custom_call.1} parent=1 // pred_fallthru
      _
    // Predicated region
    $region10: #{tpu_custom_call.1} parent=1 // pred_check
      _
    $region11: #{tpu_custom_call.1} parent=1 // pred_check_branch
      %41 = sbr.rel (0) target = $region13
    $region12: #{tpu_custom_call.1} parent=1 // pred_region
      _
    $region13: #{tpu_custom_call.1} parent=1 // pred_fallthru
      _
    // Predicated region
    $region14: #{tpu_custom_call.1} parent=1 // pred_check
      _
    $region15: #{tpu_custom_call.1} parent=1 // pred_check_branch
      %43 = sbr.rel (0) target = $region17
    $region16: #{tpu_custom_call.1} parent=1 // pred_region
      %45 = vsyncadd [#allocation6], 0
      %s46 = sshll.u32 %s3, 4
      %s47 = int_to_ptr.hbm [resolvable:$true] %s46
      %s48 = sshll.u32 [#allocation7], 4
      %s49 = int_to_ptr.vmem [resolvable:$true] %s48
      %54 = dma.hbm_to_vmem [thread:$0]  %s47, 2048, %s49, [#allocation6], 128, 128, 8
    $region17: #{tpu_custom_call.1} parent=1 // pred_fallthru
      _
    // Predicated region
    $region18: #{tpu_custom_call.1} parent=1 // pred_check
      _
    $region19: #{tpu_custom_call.1} parent=1 // pred_check_branch
      %56 = sbr.rel (0) target = $region21
    $region20: #{tpu_custom_call.1} parent=1 // pred_region
      _
    $region21: #{tpu_custom_call.1} parent=1 // pred_fallthru
      _
    // Predicated region
    $region22: #{tpu_custom_call.1} parent=1 // pred_check
      _
    $region23: #{tpu_custom_call.1} parent=1 // pred_check_branch
      %58 = sbr.rel (0) target = $region25
    $region24: #{tpu_custom_call.1} parent=1 // pred_region
      %60 = vsyncadd [#allocation9], 0
      %s61 = sshll.u32 %s5, 4
      %s62 = int_to_ptr.hbm [resolvable:$true] %s61
      %s63 = sshll.u32 [#allocation8], 4
      %s64 = int_to_ptr.vmem [resolvable:$true] %s63
      %69 = dma.hbm_to_vmem [thread:$0]  %s62, 2048, %s64, [#allocation9], 128, 128, 8
    $region25: #{tpu_custom_call.1} parent=1 // pred_fallthru
      _
    // Predicated region
    $region26: #{tpu_custom_call.1} parent=1 // pred_check
      _
    $region27: #{tpu_custom_call.1} parent=1 // pred_check_branch
      %71 = sbr.rel (0) target = $region29
    $region28: #{tpu_custom_call.1} parent=1 // pred_region
      _
    $region29: #{tpu_custom_call.1} parent=1 // pred_fallthru
      _
    // Predicated region
    $region30: #{tpu_custom_call.1} parent=1 // pred_check
      _
    $region31: #{tpu_custom_call.1} parent=1 // pred_check_branch
      %73 = sbr.rel (0) target = $region33
    $region32: #{tpu_custom_call.1} parent=1 // pred_region
      %75 = dma.done [#allocation3], 128
    $region33: #{tpu_custom_call.1} parent=1 // pred_fallthru
      _
    // Predicated region
    $region34: #{tpu_custom_call.1} parent=1 // pred_check
      _
    $region35: #{tpu_custom_call.1} parent=1 // pred_check_branch
      %77 = sbr.rel (0) target = $region37
    $region36: #{tpu_custom_call.1} parent=1 // pred_region
      %79 = dma.done [#allocation6], 2048
    $region37: #{tpu_custom_call.1} parent=1 // pred_fallthru
      _
    // Predicated region
    $region38: #{tpu_custom_call.1} parent=1 // pred_check
      _
    $region39: #{tpu_custom_call.1} parent=1 // pred_check_branch
      %81 = sbr.rel (0) target = $region41
    $region40: #{tpu_custom_call.1} parent=1 // pred_region
      %83 = dma.done [#allocation6], 2048
    $region41: #{tpu_custom_call.1} parent=1 // pred_fallthru
      _
    // Predicated region
    $region42: #{tpu_custom_call.1} parent=1 // pred_check
      _
    $region43: #{tpu_custom_call.1} parent=1 // pred_check_branch
      %85 = sbr.rel (0) target = $region45
    $region44: #{tpu_custom_call.1} parent=1 // pred_region
      %87 = dma.done [#allocation9], 2048
    $region45: #{tpu_custom_call.1} parent=1 // pred_fallthru
      _
    %v88 = vld [vmem:[%s2] sm:$0x1]
    %v89 = vld [vmem:[%s4] sm:$0x1]
    %v90 = vld [vmem:[%s6] sm:$0x1]
    %v91 = vld [vmem:[#allocation2] sm:$0xff]
    %v92 = vld [vmem:[#allocation5] sm:$0xff]
    %v93 = vld [vmem:[#allocation5 + $0x8] sm:$0xff]
    %v94 = vld [vmem:[#allocation5 + $0x10] sm:$0xff]
    %v95 = vld [vmem:[#allocation5 + $0x18] sm:$0xff]
    %v96 = vld [vmem:[#allocation5 + $0x20] sm:$0xff]
    %v97 = vld [vmem:[#allocation5 + $0x28] sm:$0xff]
    %v98 = vld [vmem:[#allocation5 + $0x30] sm:$0xff]
    %v99 = vld [vmem:[#allocation5 + $0x38] sm:$0xff]
    %v100 = vld [vmem:[#allocation5 + $0x40] sm:$0xff]
    %v101 = vld [vmem:[#allocation5 + $0x48] sm:$0xff]
    %v102 = vld [vmem:[#allocation5 + $0x50] sm:$0xff]
    %v103 = vld [vmem:[#allocation5 + $0x58] sm:$0xff]
    %v104 = vld [vmem:[#allocation5 + $0x60] sm:$0xff]
    %v105 = vld [vmem:[#allocation5 + $0x68] sm:$0xff]
    %v106 = vld [vmem:[#allocation5 + $0x70] sm:$0xff]
    %v107 = vld [vmem:[#allocation5 + $0x78] sm:$0xff]
    %v109 = vperm.slane %v88, 0
    %111 = vmatpush.msra.mxu0 %v107
    %112 = vmatpush.msra.mxu0 %v106
    %113 = vmatpush.msra.mxu0 %v105
    %114 = vmatpush.msra.mxu0 %v104
    %115 = vmatpush.msra.mxu0 %v103
    %116 = vmatpush.msra.mxu0 %v102
    %117 = vmatpush.msra.mxu0 %v101
    %118 = vmatpush.msra.mxu0 %v100
    %119 = vmatpush.msra.mxu0 %v99
    %120 = vmatpush.msra.mxu0 %v98
    %121 = vmatpush.msra.mxu0 %v97
    %122 = vmatpush.msra.mxu0 %v96
    %123 = vmatpush.msra.mxu0 %v95
    %124 = vmatpush.msra.mxu0 %v94
    %125 = vmatpush.msra.mxu0 %v93
    %126 = vmatpush.msra.mxu0 %v92
    %127 = vmatmul.f32.gmra.mxu0 %v91
    %v128 = vpop.f32.mrf.mxu0
    %v129 = vadd.f32 %v109, %v128
    %130 = vdwg.mxu0
    %v131 = vmax.f32 %v129, 0.0
    %v132 = vld [vmem:[#allocation7] sm:$0xff]
    %v133 = vld [vmem:[#allocation7 + $0x8] sm:$0xff]
    %v134 = vld [vmem:[#allocation7 + $0x10] sm:$0xff]
    %v135 = vld [vmem:[#allocation7 + $0x18] sm:$0xff]
    %v136 = vld [vmem:[#allocation7 + $0x20] sm:$0xff]
    %v137 = vld [vmem:[#allocation7 + $0x28] sm:$0xff]
    %v138 = vld [vmem:[#allocation7 + $0x30] sm:$0xff]
    %v139 = vld [vmem:[#allocation7 + $0x38] sm:$0xff]
    %v140 = vld [vmem:[#allocation7 + $0x40] sm:$0xff]
    %v141 = vld [vmem:[#allocation7 + $0x48] sm:$0xff]
    %v142 = vld [vmem:[#allocation7 + $0x50] sm:$0xff]
    %v143 = vld [vmem:[#allocation7 + $0x58] sm:$0xff]
    %v144 = vld [vmem:[#allocation7 + $0x60] sm:$0xff]
    %v145 = vld [vmem:[#allocation7 + $0x68] sm:$0xff]
    %v146 = vld [vmem:[#allocation7 + $0x70] sm:$0xff]
    %v147 = vld [vmem:[#allocation7 + $0x78] sm:$0xff]
    %v149 = vperm.slane %v89, 0
    %151 = vmatpush.msra.mxu0 %v147
    %152 = vmatpush.msra.mxu0 %v146
    %153 = vmatpush.msra.mxu0 %v145
    %154 = vmatpush.msra.mxu0 %v144
    %155 = vmatpush.msra.mxu0 %v143
    %156 = vmatpush.msra.mxu0 %v142
    %157 = vmatpush.msra.mxu0 %v141
    %158 = vmatpush.msra.mxu0 %v140
    %159 = vmatpush.msra.mxu0 %v139
    %160 = vmatpush.msra.mxu0 %v138
    %161 = vmatpush.msra.mxu0 %v137
    %162 = vmatpush.msra.mxu0 %v136
    %163 = vmatpush.msra.mxu0 %v135
    %164 = vmatpush.msra.mxu0 %v134
    %165 = vmatpush.msra.mxu0 %v133
    %166 = vmatpush.msra.mxu0 %v132
    %167 = vmatmul.f32.gmra.mxu0 %v131
    %v168 = vpop.f32.mrf.mxu0
    %v169 = vadd.f32 %v149, %v168
    %170 = vdwg.mxu0
    %v171 = vmax.f32 %v169, 0.0
    %v172 = vld [vmem:[#allocation8] sm:$0xff]
    %v173 = vld [vmem:[#allocation8 + $0x8] sm:$0xff]
    %v174 = vld [vmem:[#allocation8 + $0x10] sm:$0xff]
    %v175 = vld [vmem:[#allocation8 + $0x18] sm:$0xff]
    %v176 = vld [vmem:[#allocation8 + $0x20] sm:$0xff]
    %v177 = vld [vmem:[#allocation8 + $0x28] sm:$0xff]
    %v178 = vld [vmem:[#allocation8 + $0x30] sm:$0xff]
    %v179 = vld [vmem:[#allocation8 + $0x38] sm:$0xff]
    %v180 = vld [vmem:[#allocation8 + $0x40] sm:$0xff]
    %v181 = vld [vmem:[#allocation8 + $0x48] sm:$0xff]
    %v182 = vld [vmem:[#allocation8 + $0x50] sm:$0xff]
    %v183 = vld [vmem:[#allocation8 + $0x58] sm:$0xff]
    %v184 = vld [vmem:[#allocation8 + $0x60] sm:$0xff]
    %v185 = vld [vmem:[#allocation8 + $0x68] sm:$0xff]
    %v186 = vld [vmem:[#allocation8 + $0x70] sm:$0xff]
    %v187 = vld [vmem:[#allocation8 + $0x78] sm:$0xff]
    %v189 = vperm.slane %v90, 0
    %191 = vmatpush.msra.mxu0 %v187
    %192 = vmatpush.msra.mxu0 %v186
    %193 = vmatpush.msra.mxu0 %v185
    %194 = vmatpush.msra.mxu0 %v184
    %195 = vmatpush.msra.mxu0 %v183
    %196 = vmatpush.msra.mxu0 %v182
    %197 = vmatpush.msra.mxu0 %v181
    %198 = vmatpush.msra.mxu0 %v180
    %199 = vmatpush.msra.mxu0 %v179
    %200 = vmatpush.msra.mxu0 %v178
    %201 = vmatpush.msra.mxu0 %v177
    %202 = vmatpush.msra.mxu0 %v176
    %203 = vmatpush.msra.mxu0 %v175
    %204 = vmatpush.msra.mxu0 %v174
    %205 = vmatpush.msra.mxu0 %v173
    %206 = vmatpush.msra.mxu0 %v172
    %207 = vmatmul.f32.gmra.mxu0 %v171
    %v208 = vpop.f32.mrf.mxu0
    %v209 = vadd.f32 %v189, %v208
    %210 = vdwg.mxu0
    %211 = vst [vmem:[#allocation10] sm:$0xff] %v209
    // Predicated region
    $region46: #{tpu_custom_call.1} parent=1 // pred_check
      _
    $region47: #{tpu_custom_call.1} parent=1 // pred_check_branch
      %213 = sbr.rel (0) target = $region49
    $region48: #{tpu_custom_call.1} parent=1 // pred_region
      %215 = vsyncadd [#allocation4], 0
      %s217 = sshll.u32 [#allocation10], 4
      %s218 = int_to_ptr.vmem [resolvable:$true] %s217
      %s219 = sshll.u32 %s7, 4
      %s220 = int_to_ptr.hbm [resolvable:$true] %s219
      %222 = dma.vmem_to_hbm [thread:$0]  %s218, 128, %s220, [#allocation4]
    $region49: #{tpu_custom_call.1} parent=1 // pred_fallthru
      _
    // Predicated region
    $region50: #{tpu_custom_call.1} parent=1 // pred_check
      _
    $region51: #{tpu_custom_call.1} parent=1 // pred_check_branch
      %224 = sbr.rel (0) target = $region53
    $region52: #{tpu_custom_call.1} parent=1 // pred_region
      %226 = dma.done [#allocation4], 128
    $region53: #{tpu_custom_call.1} parent=1 // pred_fallthru
      _
    %227 = vsyncpa [#allocation3], 1
    %228 = vsyncpa [#allocation6], 1
    %229 = vsyncpa [#allocation9], 1
    %230 = vsyncpa [#allocation4], 1

</llo_original>
